<compile_context>
chip_gen: v6e
topology: v6e:2x2x1
jax: 0.10.0
libtpu: 0.0.40
codegen_flags: <defaults>
</compile_context>

<pallas_src>
import functools

import jax
import jax.numpy as jnp
import numpy as np
from jax.experimental import pallas as pl
from jax.experimental.pallas import tpu as pltpu


def _round_up(a, b):
    return (a + b - 1) // b * b


# ---------------------------------------------------------------------------
# Kernel
# ---------------------------------------------------------------------------
def _make_decoder_kernel(layer_meta):
    """layer_meta: tuple of (row_offset_in_slab, K, N) per Linear layer."""
    n_layers = len(layer_meta)

    def kernel(state_ref, w_ref, b_ref, out_ref):
        h = state_ref[...]                                  # (tile_m, state_dim) f32
        for l, (off, k, n) in enumerate(layer_meta):
            w = w_ref[off:off + k, :n]                      # (k, n) bf16, static aligned slice
            b = b_ref[l:l + 1, :n]                          # (1, n) f32
            h = jnp.dot(h.astype(jnp.bfloat16), w,
                        preferred_element_type=jnp.float32) + b
            if l < n_layers - 1:                            # ReLU between layers, none on last
                h = jnp.maximum(h, 0.0)
        out_ref[...] = h

    return kernel


# ---------------------------------------------------------------------------
# Wrapper
# ---------------------------------------------------------------------------
@functools.partial(jax.jit, static_argnames=("layer_meta", "tile_m"))
def mlp_autoencoder_forward(x, v, w_slab, b_slab, *, layer_meta, tile_m=128):
    """Batched MLPAutoEncoder.forward.

    x: (M, Nx, Fx) f32, v: (M, Nv, Fv) f32  ->  state_hat: (M, state_dim) f32
    Row i is exactly decoder(cat([x[i].flatten(), v[i].flatten()])).
    The encoder's `hidden` is dead code in the original forward and is omitted.
    tile_m: 128 works on all generations; use 256 on v6e/v7x for large M.
    """
    M = x.shape[0]
    state = jnp.concatenate(
        [x.reshape(M, -1), v.reshape(M, -1)], axis=1).astype(jnp.float32)
    state_dim = state.shape[1]
    assert state_dim == layer_meta[0][1], (state_dim, layer_meta)
    out_dim = layer_meta[-1][2]

    # Pad batch to a multiple of the tile (multiple of 8 sublanes at minimum).
    tile = min(tile_m, _round_up(M, 8))
    m_pad = _round_up(M, tile)
    if m_pad != M:
        state = jnp.pad(state, ((0, m_pad - M), (0, 0)))
    grid = (m_pad // tile,)

    flops = 2 * m_pad * sum(k * n for _, k, n in layer_meta)
    bytes_accessed = (w_slab.size * 2 + b_slab.size * 4
                      + m_pad * state_dim * 4 + m_pad * out_dim * 4)

    state_hat = pl.pallas_call(
        _make_decoder_kernel(layer_meta),
        out_shape=jax.ShapeDtypeStruct((m_pad, out_dim), jnp.float32),
        grid=grid,
        in_specs=[
            pl.BlockSpec((tile, state_dim), lambda i: (i, 0)),   # activation tile
            pl.BlockSpec(w_slab.shape, lambda i: (0, 0)),        # weights: VMEM-resident
            pl.BlockSpec(b_slab.shape, lambda i: (0, 0)),        # biases:  VMEM-resident
        ],
        out_specs=pl.BlockSpec((tile, out_dim), lambda i: (i, 0)),
        compiler_params=pltpu.CompilerParams(
            dimension_semantics=("parallel",)),                  # 2 TCs on v7x
        cost_estimate=pl.CostEstimate(
            flops=flops, transcendentals=0, bytes_accessed=bytes_accessed),
    )(state, w_slab, b_slab)
    return state_hat[:M]


# ---------------------------------------------------------------------------
# Parameter construction (PyTorch nn.Linear layout) and packing into slabs.
# ---------------------------------------------------------------------------
def make_torch_layout_params(key, dims, scale=0.05):
    """Torch nn.Linear layout: weight (out, in), bias (out,). dims = [d0, ..., dL]."""
    layers = []
    for i in range(len(dims) - 1):
        key, kw, kb = jax.random.split(key, 3)
        w = jax.random.normal(kw, (dims[i + 1], dims[i]), dtype=jnp.float32) * scale
        b = jax.random.normal(kb, (dims[i + 1],), dtype=jnp.float32) * scale
        layers.append((w, b))
    return layers


def pack_mlp_params(layers):
    """Pack torch-layout layers into one bf16 weight slab + one f32 bias slab.

    Weight slab rows: each layer's (K, N) weight (transposed to in-major),
    K padded to a multiple of 16 (bf16 sublane packing), stacked along rows;
    all N padded to a common multiple of 128 -> every in-kernel slice is
    tile-aligned and lane-dense.
    """
    n_max = _round_up(max(w.shape[0] for w, _ in layers), 128)
    w_blocks, metas, off = [], [], 0
    for w, _ in layers:
        n, k = w.shape                                       # torch: (out, in)
        k_pad = _round_up(k, 16)
        blk = jnp.zeros((k_pad, n_max), jnp.bfloat16)
        blk = blk.at[:k, :n].set(w.T.astype(jnp.bfloat16))
        w_blocks.append(blk)
        metas.append((off, k, n))
        off += k_pad
    w_slab = jnp.concatenate(w_blocks, axis=0)

    b_slab = jnp.zeros((len(layers), n_max), jnp.float32)
    for l, (_, b) in enumerate(layers):
        b_slab = b_slab.at[l, :b.shape[0]].set(b.astype(jnp.float32))
    return w_slab, b_slab, tuple(metas)


def reference_forward(x, v, dec_layers):
    """Numpy replica of the PyTorch forward's returned value (state_hat), batched."""
    M = x.shape[0]
    state = np.concatenate(
        [np.asarray(x, np.float32).reshape(M, -1),
         np.asarray(v, np.float32).reshape(M, -1)], axis=1)
    h = state
    for i, (w, b) in enumerate(dec_layers):
        h = h @ np.asarray(w, np.float32).T + np.asarray(b, np.float32)
        if i < len(dec_layers) - 1:
            h = np.maximum(h, 0.0)
    return h


if __name__ == "__main__":
    # plb-style particle state: per-particle positions x and velocities v.
    n_particles, feat = 64, 3
    state_dim = 2 * n_particles * feat                 # 384 (multiple of 128)
    n_layers = 3
    # dim_list[0] == dim_list[-1] is required because the original forward feeds
    # `state` to the decoder, whose dims are reversed(dim_list).
    dim_list = [state_dim, 256, 128, state_dim]
    dec_dims = list(reversed(dim_list))                # decoder = MLP over reversed dims

    M = 256                                            # batch of states (2 grid steps of 128)
    key = jax.random.PRNGKey(0)
    kx, kv, kd = jax.random.split(key, 3)
    x = jax.random.normal(kx, (M, n_particles, feat), dtype=jnp.float32)
    v = jax.random.normal(kv, (M, n_particles, feat), dtype=jnp.float32)

    dec_torch = make_torch_layout_params(kd, dec_dims)
    w_slab, b_slab, layer_meta = pack_mlp_params(dec_torch)

    state_hat = mlp_autoencoder_forward(
        x, v, w_slab, b_slab, layer_meta=layer_meta, tile_m=128)
    state_hat = jax.block_until_ready(state_hat)

    ref = reference_forward(x, v, dec_torch)

    assert state_hat.shape == (M, state_dim), state_hat.shape
    # Tolerance covers bf16 weight/activation rounding with f32 MXU accumulation;
    # wiring errors would produce O(1) mismatches and still fail.
    np.testing.assert_allclose(np.asarray(state_hat), ref, rtol=3e-2, atol=3e-2)
    print("KERNEL_OK")
</pallas_src>

<mosaic_0001>
module attributes {stable_mosaic.version = 11 : i64} {
  func.func @kernel(%arg0: i32, %arg1: memref<128x384xf32, #tpu.memory_space<vmem>>, %arg2: memref<768x384xbf16, #tpu.memory_space<vmem>>, %arg3: memref<3x384xf32, #tpu.memory_space<vmem>>, %arg4: memref<128x384xf32, #tpu.memory_space<vmem>>) attributes {dimension_semantics = [#tpu.dimension_semantics<parallel>], iteration_bounds = array<i64: 2>, scalar_prefetch = 0 : i64, scratch_operands = 0 : i64, tpu.core_type = #tpu.core_type<tc>, window_params = [{transform_indices = @transform_0, window_bounds = array<i64: 128, 384>}, {pipeline_mode = #tpu.pipeline_mode<synchronous>, transform_indices = @transform_1, window_bounds = array<i64: 768, 384>}, {pipeline_mode = #tpu.pipeline_mode<synchronous>, transform_indices = @transform_2, window_bounds = array<i64: 3, 384>}, {transform_indices = @transform_3, window_bounds = array<i64: 128, 384>}]} {
    %c0 = arith.constant 0 : index
    %c0_0 = arith.constant 0 : index
    %0 = vector.load %arg1[%c0, %c0_0] : memref<128x384xf32, #tpu.memory_space<vmem>>, vector<128x384xf32>
    %c0_1 = arith.constant 0 : index
    %c0_2 = arith.constant 0 : index
    %1 = vector.load %arg2[%c0_1, %c0_2] : memref<768x384xbf16, #tpu.memory_space<vmem>>, vector<384x128xbf16>
    %c0_3 = arith.constant 0 : index
    %c0_4 = arith.constant 0 : index
    %2 = vector.load %arg3[%c0_3, %c0_4] : memref<3x384xf32, #tpu.memory_space<vmem>>, vector<1x128xf32>
    %3 = arith.truncf %0 : vector<128x384xf32> to vector<128x384xbf16>
    %cst = arith.constant dense<0.000000e+00> : vector<128x128xf32>
    %4 = tpu.matmul %3, %1, %cst {dimension_numbers = #tpu.dot_dimension_numbers<[1], [0], [0], [1], [0, 0, 1, 1], [], []>} : vector<128x384xbf16>, vector<384x128xbf16>, vector<128x128xf32> -> vector<128x128xf32>
    %5 = vector.broadcast %2 : vector<1x128xf32> to vector<128x128xf32>
    %6 = arith.addf %4, %5 : vector<128x128xf32>
    %cst_5 = arith.constant 0.000000e+00 : f32
    %7 = vector.broadcast %cst_5 : f32 to vector<128x128xf32>
    %8 = arith.maximumf %6, %7 : vector<128x128xf32>
    %c384 = arith.constant 384 : index
    %c0_6 = arith.constant 0 : index
    %9 = vector.load %arg2[%c384, %c0_6] : memref<768x384xbf16, #tpu.memory_space<vmem>>, vector<128x256xbf16>
    %c1 = arith.constant 1 : index
    %c0_7 = arith.constant 0 : index
    %10 = vector.load %arg3[%c1, %c0_7] : memref<3x384xf32, #tpu.memory_space<vmem>>, vector<1x256xf32>
    %11 = arith.truncf %8 : vector<128x128xf32> to vector<128x128xbf16>
    %cst_8 = arith.constant dense<0.000000e+00> : vector<128x256xf32>
    %12 = tpu.matmul %11, %9, %cst_8 {dimension_numbers = #tpu.dot_dimension_numbers<[1], [0], [0], [1], [0, 0, 1, 1], [], []>} : vector<128x128xbf16>, vector<128x256xbf16>, vector<128x256xf32> -> vector<128x256xf32>
    %13 = vector.broadcast %10 : vector<1x256xf32> to vector<128x256xf32>
    %14 = arith.addf %12, %13 : vector<128x256xf32>
    %cst_9 = arith.constant 0.000000e+00 : f32
    %15 = vector.broadcast %cst_9 : f32 to vector<128x256xf32>
    %16 = arith.maximumf %14, %15 : vector<128x256xf32>
    %c512 = arith.constant 512 : index
    %c0_10 = arith.constant 0 : index
    %17 = vector.load %arg2[%c512, %c0_10] : memref<768x384xbf16, #tpu.memory_space<vmem>>, vector<256x384xbf16>
    %c2 = arith.constant 2 : index
    %c0_11 = arith.constant 0 : index
    %18 = vector.load %arg3[%c2, %c0_11] : memref<3x384xf32, #tpu.memory_space<vmem>>, vector<1x384xf32>
    %19 = arith.truncf %16 : vector<128x256xf32> to vector<128x256xbf16>
    %cst_12 = arith.constant dense<0.000000e+00> : vector<128x384xf32>
    %20 = tpu.matmul %19, %17, %cst_12 {dimension_numbers = #tpu.dot_dimension_numbers<[1], [0], [0], [1], [0, 0, 1, 1], [], []>} : vector<128x256xbf16>, vector<256x384xbf16>, vector<128x384xf32> -> vector<128x384xf32>
    %21 = vector.broadcast %18 : vector<1x384xf32> to vector<128x384xf32>
    %22 = arith.addf %20, %21 : vector<128x384xf32>
    %c0_13 = arith.constant 0 : index
    %c0_14 = arith.constant 0 : index
    %23 = vector.load %arg4[%c0_13, %c0_14] : memref<128x384xf32, #tpu.memory_space<vmem>>, vector<128x384xf32>
    tpu.vector_store %arg4[%c0_13, %c0_14], %22 {strides = array<i32>} : memref<128x384xf32, #tpu.memory_space<vmem>>, vector<128x384xf32>,
    return
  }
  func.func @transform_0(%arg0: i32) -> (i32, i32) {
    %c0_i32 = arith.constant 0 : i32
    %c0_i32_0 = arith.constant 0 : i32
    return %arg0, %c0_i32 : i32, i32
  }
  func.func @transform_1(%arg0: i32) -> (i32, i32) {
    %c0_i32 = arith.constant 0 : i32
    %c0_i32_0 = arith.constant 0 : i32
    %c0_i32_1 = arith.constant 0 : i32
    return %c0_i32, %c0_i32_0 : i32, i32
  }
  func.func @transform_2(%arg0: i32) -> (i32, i32) {
    %c0_i32 = arith.constant 0 : i32
    %c0_i32_0 = arith.constant 0 : i32
    %c0_i32_1 = arith.constant 0 : i32
    return %c0_i32, %c0_i32_0 : i32, i32
  }
  func.func @transform_3(%arg0: i32) -> (i32, i32) {
    %c0_i32 = arith.constant 0 : i32
    %c0_i32_0 = arith.constant 0 : i32
    return %arg0, %c0_i32 : i32, i32
  }
}

</mosaic_0001>

<llo_original>
// kernel: mlp_autoencoder_forward.1
$region0: #{mlp_autoencoder_forward.1}
  #allocation0 [shape = 'u32[]', space=smem, size = 0x4, offset = 0x4, fixed_abs, tag = 'smem constant byte address 0x4 - core index']
  #allocation1 [shape = 'u32[144,128]{1,0:T(1,128)}', space=vmem, size = 0x12000, scoped, tag = 'internal scratch']
  %s0 = inlined_call_operand.vmem [shape: f32[256,384], index: 0, kind: input, shape index: {}]
  %s1 = inlined_call_operand.vmem [shape: bf16[768,384], index: 1, kind: input, shape index: {}]
  %s2 = inlined_call_operand.vmem [shape: f32[3,384], index: 2, kind: input, shape index: {}]
  %s3 = inlined_call_operand.hbm [shape: f32[256,384], index: 3, kind: output, shape index: {}]
  %s4 = sld [smem:[#allocation0]]
  $region45: #{mlp_autoencoder_forward.1} parent=0
    _
  %s6 = ssub.s32 1, %s4
  %s7 = scalar_select 0, %s6, %s4
  $region1: #{mlp_autoencoder_forward.1} parent=0
    #allocation2 [shape = 'u8[393216]{0}', space=vmem, size = 0x60000, scoped, tag = 'output window, operand 0']
    #allocation3 [shape = 's32[2]{0}', space=sflag, size = 0x8, scoped, tag = 'scoped memory for mlp_autoencoder_forward.1']
    %8 = vsyncpa [#allocation3], 0
    %s9 = scalar_lea.sflag [#allocation3], 1
    %10 = vsyncpa %s9, 0
    loop: start=0, step=1, limit=4
    $region2: #{mlp_autoencoder_forward.1} parent=1 // loop_pre_header
      _
    $region3: #{mlp_autoencoder_forward.1} parent=1 // loop_header
      %s12 = sphi 0, %s16
      %p13 = scmp.ge.s32.totalorder %s12, 4
      %s22 = sphi 0, %s24
      %s25 = sphi 0, %s22
      %s26 = sphi 0, %s25
      %s42 = sphi 0, %s26
      %s46 = sphi 0, %s46
      %s48 = sphi 0, %s46
      %s49 = sphi 0, %s48
      %s63 = sphi 0, %s49
      %s67 = sphi 0, %s67
      %s69 = sphi 0, %s67
      %s70 = sphi 0, %s69
      %s84 = sphi 0, %s70
      %s90 = sphi 0, %s92
      %s93 = sphi 0, %s90
      %s94 = sphi 0, %s93
      %s110 = sphi 0, %s94
    $region4: #{mlp_autoencoder_forward.1} parent=1 // loop_header_branch
      %15 = sbr.rel (%p13) target = $region8
    $region5: #{mlp_autoencoder_forward.1} parent=1 // loop_body
      %s17 = ssub.s32 %s12, 1
      %s18 = ssub.s32 %s12, 2
      %s19 = sadd.s32 %s12, 1
      %s20 = ssub.s32 %s12, %s19
      %p21 = scmp.eq.s32.totalorder %s20, 0
      %s23 = sadd.s32 %s22, 1
      %s24 = scalar_select %p21, %s22, %s23
      %p27 = pneg %p21
      %p28 = scmp.eq.s32.totalorder %s12, 1
      %p29 = por %p27, %p28
      %p30 = scmp.ne.s32.totalorder %s22, %s25
      %p31 = scmp.eq.s32.totalorder %s12, 0
      %p32 = por %p30, %p31
      %p33 = scmp.ne.s32.totalorder %s22, %s25
      %p34 = scmp.eq.s32.totalorder %s17, 1
      %p35 = por %p33, %p34
      %p36 = scmp.ne.s32.totalorder %s25, %s26
      %p37 = scmp.eq.s32.totalorder %s17, 0
      %p38 = por %p36, %p37
      %p39 = scmp.ne.s32.totalorder %s25, %s26
      %p40 = scmp.eq.s32.totalorder %s18, 1
      %p41 = por %p39, %p40
      %p43 = scmp.ne.s32.totalorder %s26, %s42
      %p44 = scmp.eq.s32.totalorder %s18, 0
      %p45 = por %p43, %p44
      %s47 = sadd.s32 %s46, 1
      %p50 = scmp.eq.s32.totalorder %s12, 1
      %p51 = scmp.ne.s32.totalorder %s46, %s48
      %p52 = scmp.eq.s32.totalorder %s12, 0
      %p53 = por %p51, %p52
      %p54 = scmp.ne.s32.totalorder %s46, %s48
      %p55 = scmp.eq.s32.totalorder %s17, 1
      %p56 = por %p54, %p55
      %p57 = scmp.ne.s32.totalorder %s48, %s49
      %p58 = scmp.eq.s32.totalorder %s17, 0
      %p59 = por %p57, %p58
      %p60 = scmp.ne.s32.totalorder %s48, %s49
      %p61 = scmp.eq.s32.totalorder %s18, 1
      %p62 = por %p60, %p61
      %p64 = scmp.ne.s32.totalorder %s49, %s63
      %p65 = scmp.eq.s32.totalorder %s18, 0
      %p66 = por %p64, %p65
      %s68 = sadd.s32 %s67, 1
      %p71 = scmp.eq.s32.totalorder %s12, 1
      %p72 = scmp.ne.s32.totalorder %s67, %s69
      %p73 = scmp.eq.s32.totalorder %s12, 0
      %p74 = por %p72, %p73
      %p75 = scmp.ne.s32.totalorder %s67, %s69
      %p76 = scmp.eq.s32.totalorder %s17, 1
      %p77 = por %p75, %p76
      %p78 = scmp.ne.s32.totalorder %s69, %s70
      %p79 = scmp.eq.s32.totalorder %s17, 0
      %p80 = por %p78, %p79
      %p81 = scmp.ne.s32.totalorder %s69, %s70
      %p82 = scmp.eq.s32.totalorder %s18, 1
      %p83 = por %p81, %p82
      %p85 = scmp.ne.s32.totalorder %s70, %s84
      %p86 = scmp.eq.s32.totalorder %s18, 0
      %p87 = por %p85, %p86
      %s88 = ssub.s32 %s12, %s19
      %p89 = scmp.eq.s32.totalorder %s88, 0
      %s91 = sadd.s32 %s90, 1
      %s92 = scalar_select %p89, %s90, %s91
      %p95 = pneg %p89
      %p96 = scmp.eq.s32.totalorder %s12, 1
      %p97 = por %p95, %p96
      %p98 = scmp.ne.s32.totalorder %s90, %s93
      %p99 = scmp.eq.s32.totalorder %s12, 0
      %p100 = por %p98, %p99
      %p101 = scmp.ne.s32.totalorder %s90, %s93
      %p102 = scmp.eq.s32.totalorder %s17, 1
      %p103 = por %p101, %p102
      %p104 = scmp.ne.s32.totalorder %s93, %s94
      %p105 = scmp.eq.s32.totalorder %s17, 0
      %p106 = por %p104, %p105
      %p107 = scmp.ne.s32.totalorder %s93, %s94
      %p108 = scmp.eq.s32.totalorder %s18, 1
      %p109 = por %p107, %p108
      %p111 = scmp.ne.s32.totalorder %s94, %s110
      %p112 = scmp.eq.s32.totalorder %s18, 0
      %p113 = por %p111, %p112
      %p114 = scmp.le.s32.totalorder 1, %s12
      %p115 = scmp.lt.s32.totalorder %s12, 3
      %p116 = pnand %p114, %p115
      %p117 = pneg %p116
      // Predicated region
      $region9: #{mlp_autoencoder_forward.1} parent=5 // pred_check
        _
      $region10: #{mlp_autoencoder_forward.1} parent=5 // pred_check_branch
        %119 = sbr.rel (%p116) target = $region12
      $region11: #{mlp_autoencoder_forward.1} parent=5 // pred_region
        %s120 = ssub.s32 %s12, 1
        // Predicated region
        $region13: #{mlp_autoencoder_forward.1} parent=11 // pred_check
          %p121 = pneg %p59
        $region14: #{mlp_autoencoder_forward.1} parent=11 // pred_check_branch
          %123 = sbr.rel (%p121) target = $region16
        $region15: #{mlp_autoencoder_forward.1} parent=11 // pred_region
          _
        $region16: #{mlp_autoencoder_forward.1} parent=11 // pred_fallthru
          _
        // Predicated region
        $region17: #{mlp_autoencoder_forward.1} parent=11 // pred_check
          %p124 = pneg %p80
        $region18: #{mlp_autoencoder_forward.1} parent=11 // pred_check_branch
          %126 = sbr.rel (%p124) target = $region20
        $region19: #{mlp_autoencoder_forward.1} parent=11 // pred_region
          _
        $region20: #{mlp_autoencoder_forward.1} parent=11 // pred_fallthru
          _
      $region12: #{mlp_autoencoder_forward.1} parent=5 // pred_fallthru
        _
      %p127 = scmp.lt.s32.totalorder %s12, 2
      // Predicated region
      $region21: #{mlp_autoencoder_forward.1} parent=5 // pred_check
        %p128 = pneg %p127
      $region22: #{mlp_autoencoder_forward.1} parent=5 // pred_check_branch
        %130 = sbr.rel (%p128) target = $region24
      $region23: #{mlp_autoencoder_forward.1} parent=5 // pred_region
        // Predicated region
        $region25: #{mlp_autoencoder_forward.1} parent=23 // pred_check
          %p131 = pneg %p32
        $region26: #{mlp_autoencoder_forward.1} parent=23 // pred_check_branch
          %133 = sbr.rel (%p131) target = $region28
        $region27: #{mlp_autoencoder_forward.1} parent=23 // pred_region
          %s134 = smul.u32 16, %s12
          %p135 = scmp.lt.s32.totalorder %s134, 31
          %s136 = scalar_select %p135, %s134, 31
          %s137 = smul.addr %s136, 3
          %s138 = smul.addr %s137, 8
          %s139 = scalar_lea.vmem %s0, %s138
          %s140 = smul.u32 16, %s12
        $region28: #{mlp_autoencoder_forward.1} parent=23 // pred_fallthru
          _
      $region24: #{mlp_autoencoder_forward.1} parent=5 // pred_fallthru
        _
      %p141 = scmp.le.s32.totalorder 1, %s12
      %p142 = scmp.lt.s32.totalorder %s12, 3
      %p143 = pnand %p141, %p142
      %p144 = pneg %p143
      // Predicated region
      $region29: #{mlp_autoencoder_forward.1} parent=5 // pred_check
        _
      $region30: #{mlp_autoencoder_forward.1} parent=5 // pred_check_branch
        %146 = sbr.rel (%p143) target = $region32
      $region31: #{mlp_autoencoder_forward.1} parent=5 // pred_region
        %s147 = ssub.s32 %s12, 1
        %s148 = smul.u32 16, %s17
        %p149 = scmp.lt.s32.totalorder %s148, 31
        %s150 = scalar_select %p149, %s148, 31
        %s151 = smul.addr %s150, 3
        %s152 = smul.addr %s151, 8
        %s153 = scalar_lea.vmem %s0, %s152
        %p154 = pneg %p38
        %p155 = pneg %p35
        %p156 = pneg %p59
        %p157 = pneg %p56
        %p158 = pneg %p80
        %p159 = pneg %p77
        %p160 = pneg %p106
        %p161 = pneg %p103
        %s162 = sand.u32 %s93, 1
        %s163 = scalar_lea.sflag [#allocation3], %s162
        %s164 = sand.u32 %s93, 1
        %s165 = smul.addr %s164, 384
        %s166 = scalar_lea.vmem [#allocation2], %s165
        %s167 = smul.u32 16, %s17
        %p168 = scmp.lt.s32.totalorder %s167, 31
        %s169 = scalar_select %p168, %s167, 31
        %s170 = smul.addr %s169, 3
        %s171 = smul.addr %s170, 8
        %s172 = scalar_lea.vmem %s0, %s171
        %s173 = smul.u32 16, %s17
        %s174 = smul.u32 16, %s17
        %v176 = vld [vmem:[%s172] sm:$0xff]
        %v177 = vld [vmem:[%s172 + $0x8] sm:$0xff]
        %v178 = vld [vmem:[%s172 + $0x10] sm:$0xff]
        %v179 = vld [vmem:[%s172 + $0x18] sm:$0xff]
        %v180 = vld [vmem:[%s172 + $0x20] sm:$0xff]
        %v181 = vld [vmem:[%s172 + $0x28] sm:$0xff]
        %v182 = vld [vmem:[%s172 + $0x30] sm:$0xff]
        %v183 = vld [vmem:[%s172 + $0x38] sm:$0xff]
        %v184 = vld [vmem:[%s172 + $0x40] sm:$0xff]
        %v185 = vld [vmem:[%s172 + $0x48] sm:$0xff]
        %v186 = vld [vmem:[%s172 + $0x50] sm:$0xff]
        %v187 = vld [vmem:[%s172 + $0x58] sm:$0xff]
        %v188 = vld [vmem:[%s172 + $0x60] sm:$0xff]
        %v189 = vld [vmem:[%s172 + $0x68] sm:$0xff]
        %v190 = vld [vmem:[%s172 + $0x70] sm:$0xff]
        %v191 = vld [vmem:[%s172 + $0x78] sm:$0xff]
        %v192 = vld [vmem:[%s172 + $0x80] sm:$0xff]
        %v193 = vld [vmem:[%s172 + $0x88] sm:$0xff]
        %v194 = vld [vmem:[%s172 + $0x90] sm:$0xff]
        %v195 = vld [vmem:[%s172 + $0x98] sm:$0xff]
        %v196 = vld [vmem:[%s172 + $0xa0] sm:$0xff]
        %v197 = vld [vmem:[%s172 + $0xa8] sm:$0xff]
        %v198 = vld [vmem:[%s172 + $0xb0] sm:$0xff]
        %v199 = vld [vmem:[%s172 + $0xb8] sm:$0xff]
        %v200 = vld [vmem:[%s172 + $0xc0] sm:$0xff]
        %v201 = vld [vmem:[%s172 + $0xc8] sm:$0xff]
        %v202 = vld [vmem:[%s172 + $0xd0] sm:$0xff]
        %v203 = vld [vmem:[%s172 + $0xd8] sm:$0xff]
        %v204 = vld [vmem:[%s172 + $0xe0] sm:$0xff]
        %v205 = vld [vmem:[%s172 + $0xe8] sm:$0xff]
        %v206 = vld [vmem:[%s172 + $0xf0] sm:$0xff]
        %v207 = vld [vmem:[%s172 + $0xf8] sm:$0xff]
        %v208 = vld [vmem:[%s172 + $0x100] sm:$0xff]
        %v209 = vld [vmem:[%s172 + $0x108] sm:$0xff]
        %v210 = vld [vmem:[%s172 + $0x110] sm:$0xff]
        %v211 = vld [vmem:[%s172 + $0x118] sm:$0xff]
        %v212 = vld [vmem:[%s172 + $0x120] sm:$0xff]
        %v213 = vld [vmem:[%s172 + $0x128] sm:$0xff]
        %v214 = vld [vmem:[%s172 + $0x130] sm:$0xff]
        %v215 = vld [vmem:[%s172 + $0x138] sm:$0xff]
        %v216 = vld [vmem:[%s172 + $0x140] sm:$0xff]
        %v217 = vld [vmem:[%s172 + $0x148] sm:$0xff]
        %v218 = vld [vmem:[%s172 + $0x150] sm:$0xff]
        %v219 = vld [vmem:[%s172 + $0x158] sm:$0xff]
        %v220 = vld [vmem:[%s172 + $0x160] sm:$0xff]
        %v221 = vld [vmem:[%s172 + $0x168] sm:$0xff]
        %v222 = vld [vmem:[%s172 + $0x170] sm:$0xff]
        %v223 = vld [vmem:[%s172 + $0x178] sm:$0xff]
        %v224 = vld [vmem:[%s1] sm:$0xf]
        %v225 = vld [vmem:[%s1 + $0xc] sm:$0xf]
        %v226 = vld [vmem:[%s1 + $0x18] sm:$0xf]
        %v227 = vld [vmem:[%s1 + $0x24] sm:$0xf]
        %v228 = vld [vmem:[%s1 + $0x30] sm:$0xf]
        %v229 = vld [vmem:[%s1 + $0x3c] sm:$0xf]
        %v230 = vld [vmem:[%s1 + $0x48] sm:$0xf]
        %v231 = vld [vmem:[%s1 + $0x54] sm:$0xf]
        %v232 = vld [vmem:[%s1 + $0x60] sm:$0xf]
        %v233 = vld [vmem:[%s1 + $0x6c] sm:$0xf]
        %v234 = vld [vmem:[%s1 + $0x78] sm:$0xf]
        %v235 = vld [vmem:[%s1 + $0x84] sm:$0xf]
        %v236 = vld [vmem:[%s1 + $0x90] sm:$0xf]
        %v237 = vld [vmem:[%s1 + $0x9c] sm:$0xf]
        %v238 = vld [vmem:[%s1 + $0xa8] sm:$0xf]
        %v239 = vld [vmem:[%s1 + $0xb4] sm:$0xf]
        %v240 = vld [vmem:[%s1 + $0xc0] sm:$0xf]
        %v241 = vld [vmem:[%s1 + $0xcc] sm:$0xf]
        %v242 = vld [vmem:[%s1 + $0xd8] sm:$0xf]
        %v243 = vld [vmem:[%s1 + $0xe4] sm:$0xf]
        %v244 = vld [vmem:[%s1 + $0xf0] sm:$0xf]
        %v245 = vld [vmem:[%s1 + $0xfc] sm:$0xf]
        %v246 = vld [vmem:[%s1 + $0x108] sm:$0xf]
        %v247 = vld [vmem:[%s1 + $0x114] sm:$0xf]
        %v248 = vld [vmem:[%s1 + $0x120] sm:$0xf]
        %v249 = vld [vmem:[%s1 + $0x12c] sm:$0xf]
        %v250 = vld [vmem:[%s1 + $0x138] sm:$0xf]
        %v251 = vld [vmem:[%s1 + $0x144] sm:$0xf]
        %v252 = vld [vmem:[%s1 + $0x150] sm:$0xf]
        %v253 = vld [vmem:[%s1 + $0x15c] sm:$0xf]
        %v254 = vld [vmem:[%s1 + $0x168] sm:$0xf]
        %v255 = vld [vmem:[%s1 + $0x174] sm:$0xf]
        %v256 = vld [vmem:[%s1 + $0x180] sm:$0xf]
        %v257 = vld [vmem:[%s1 + $0x18c] sm:$0xf]
        %v258 = vld [vmem:[%s1 + $0x198] sm:$0xf]
        %v259 = vld [vmem:[%s1 + $0x1a4] sm:$0xf]
        %v260 = vld [vmem:[%s1 + $0x1b0] sm:$0xf]
        %v261 = vld [vmem:[%s1 + $0x1bc] sm:$0xf]
        %v262 = vld [vmem:[%s1 + $0x1c8] sm:$0xf]
        %v263 = vld [vmem:[%s1 + $0x1d4] sm:$0xf]
        %v264 = vld [vmem:[%s1 + $0x1e0] sm:$0xf]
        %v265 = vld [vmem:[%s1 + $0x1ec] sm:$0xf]
        %v266 = vld [vmem:[%s1 + $0x1f8] sm:$0xf]
        %v267 = vld [vmem:[%s1 + $0x204] sm:$0xf]
        %v268 = vld [vmem:[%s1 + $0x210] sm:$0xf]
        %v269 = vld [vmem:[%s1 + $0x21c] sm:$0xf]
        %v270 = vld [vmem:[%s1 + $0x228] sm:$0xf]
        %v271 = vld [vmem:[%s1 + $0x234] sm:$0xf]
        %v272 = vld [vmem:[%s2] sm:$0x1]
        %v273 = vpack.c.bf16 %v179, %v176
        %v274 = vpack.c.bf16 %v180, %v177
        %v275 = vpack.c.bf16 %v181, %v178
        %v276 = vpack.c.bf16 %v185, %v182
        %v277 = vpack.c.bf16 %v186, %v183
        %v278 = vpack.c.bf16 %v187, %v184
        %v279 = vpack.c.bf16 %v191, %v188
        %v280 = vpack.c.bf16 %v192, %v189
        %v281 = vpack.c.bf16 %v193, %v190
        %v282 = vpack.c.bf16 %v197, %v194
        %v283 = vpack.c.bf16 %v198, %v195
        %v284 = vpack.c.bf16 %v199, %v196
        %v285 = vpack.c.bf16 %v203, %v200
        %v286 = vpack.c.bf16 %v204, %v201
        %v287 = vpack.c.bf16 %v205, %v202
        %v288 = vpack.c.bf16 %v209, %v206
        %v289 = vpack.c.bf16 %v210, %v207
        %v290 = vpack.c.bf16 %v211, %v208
        %v291 = vpack.c.bf16 %v215, %v212
        %v292 = vpack.c.bf16 %v216, %v213
        %v293 = vpack.c.bf16 %v217, %v214
        %v294 = vpack.c.bf16 %v221, %v218
        %v295 = vpack.c.bf16 %v222, %v219
        %v296 = vpack.c.bf16 %v223, %v220
        %v297 = vlaneseq
        %v298 = vshrl.u32 %v297, 7
        %v299 = vsub.s32 0, %v298
        %v300 = vrot.slane %v272, %v299
        %v349 = vunpack.c.l.b16 %v224
        %v350 = vunpack.c.l.b16 %v225
        %v351 = vunpack.c.l.b16 %v226
        %v352 = vunpack.c.l.b16 %v227
        %v353 = vunpack.c.l.b16 %v228
        %v354 = vunpack.c.l.b16 %v229
        %v355 = vunpack.c.l.b16 %v230
        %v356 = vunpack.c.l.b16 %v231
        %v357 = vunpack.c.l.b16 %v232
        %v358 = vunpack.c.l.b16 %v233
        %v359 = vunpack.c.l.b16 %v234
        %v360 = vunpack.c.l.b16 %v235
        %v361 = vunpack.c.l.b16 %v236
        %v362 = vunpack.c.l.b16 %v237
        %v363 = vunpack.c.l.b16 %v238
        %v364 = vunpack.c.l.b16 %v239
        %v365 = vunpack.c.l.b16 %v240
        %v366 = vunpack.c.l.b16 %v241
        %v367 = vunpack.c.l.b16 %v242
        %v368 = vunpack.c.l.b16 %v243
        %v369 = vunpack.c.l.b16 %v244
        %v370 = vunpack.c.l.b16 %v245
        %v371 = vunpack.c.l.b16 %v246
        %v372 = vunpack.c.l.b16 %v247
        %v373 = vunpack.c.l.b16 %v248
        %v374 = vunpack.c.l.b16 %v249
        %v375 = vunpack.c.l.b16 %v250
        %v376 = vunpack.c.l.b16 %v251
        %v377 = vunpack.c.l.b16 %v252
        %v378 = vunpack.c.l.b16 %v253
        %v379 = vunpack.c.l.b16 %v254
        %v380 = vunpack.c.l.b16 %v255
        %v381 = vunpack.c.l.b16 %v256
        %v382 = vunpack.c.l.b16 %v257
        %v383 = vunpack.c.l.b16 %v258
        %v384 = vunpack.c.l.b16 %v259
        %v385 = vunpack.c.l.b16 %v260
        %v386 = vunpack.c.l.b16 %v261
        %v387 = vunpack.c.l.b16 %v262
        %v388 = vunpack.c.l.b16 %v263
        %v389 = vunpack.c.l.b16 %v264
        %v390 = vunpack.c.l.b16 %v265
        %v391 = vunpack.c.l.b16 %v266
        %v392 = vunpack.c.l.b16 %v267
        %v393 = vunpack.c.l.b16 %v268
        %v394 = vunpack.c.l.b16 %v269
        %v395 = vunpack.c.l.b16 %v270
        %v396 = vunpack.c.l.b16 %v271
        %v397 = vpack.c.b16 %v350, %v349
        %v398 = vpack.c.b16 %v352, %v351
        %v399 = vpack.c.b16 %v354, %v353
        %v400 = vpack.c.b16 %v356, %v355
        %v401 = vpack.c.b16 %v358, %v357
        %v402 = vpack.c.b16 %v360, %v359
        %v403 = vpack.c.b16 %v362, %v361
        %v404 = vpack.c.b16 %v364, %v363
        %v405 = vpack.c.b16 %v366, %v365
        %v406 = vpack.c.b16 %v368, %v367
        %v407 = vpack.c.b16 %v370, %v369
        %v408 = vpack.c.b16 %v372, %v371
        %v409 = vpack.c.b16 %v374, %v373
        %v410 = vpack.c.b16 %v376, %v375
        %v411 = vpack.c.b16 %v378, %v377
        %v412 = vpack.c.b16 %v380, %v379
        %v413 = vpack.c.b16 %v382, %v381
        %v414 = vpack.c.b16 %v384, %v383
        %v415 = vpack.c.b16 %v386, %v385
        %v416 = vpack.c.b16 %v388, %v387
        %v417 = vpack.c.b16 %v390, %v389
        %v418 = vpack.c.b16 %v392, %v391
        %v419 = vpack.c.b16 %v394, %v393
        %v420 = vpack.c.b16 %v396, %v395
        %445 = vmatprep.subr.bf16.mxu0 0
        %446 = vmatpush1.bf16.msra.mxu0 %v404
        %447 = vmatprep.subr.bf16.mxu0 0
        %448 = vmatpush1.bf16.msra.mxu0 %v403
        %449 = vmatprep.subr.bf16.mxu0 0
        %450 = vmatpush1.bf16.msra.mxu0 %v402
        %451 = vmatprep.subr.bf16.mxu0 0
        %452 = vmatpush1.bf16.msra.mxu0 %v401
        %453 = vmatprep.subr.bf16.mxu0 0
        %454 = vmatpush1.bf16.msra.mxu0 %v400
        %455 = vmatprep.subr.bf16.mxu0 0
        %456 = vmatpush1.bf16.msra.mxu0 %v399
        %457 = vmatprep.subr.bf16.mxu0 0
        %458 = vmatpush1.bf16.msra.mxu0 %v398
        %459 = vmatprep.subr.bf16.mxu0 0
        %460 = vmatpush1.bf16.msra.mxu0 %v397
        %461 = vmatprep.subr.bf16.mxu0 0
        %462 = vmatpush2.bf16.msra.mxu0 %v412
        %463 = vmatprep.subr.bf16.mxu0 0
        %464 = vmatpush2.bf16.msra.mxu0 %v411
        %465 = vmatprep.subr.bf16.mxu0 0
        %466 = vmatpush2.bf16.msra.mxu0 %v410
        %467 = vmatprep.subr.bf16.mxu0 0
        %468 = vmatpush2.bf16.msra.mxu0 %v409
        %469 = vmatprep.subr.bf16.mxu0 0
        %470 = vmatpush2.bf16.msra.mxu0 %v408
        %471 = vmatprep.subr.bf16.mxu0 0
        %472 = vmatpush2.bf16.msra.mxu0 %v407
        %473 = vmatprep.subr.bf16.mxu0 0
        %474 = vmatpush2.bf16.msra.mxu0 %v406
        %475 = vmatprep.subr.bf16.mxu0 0
        %476 = vmatpush2.bf16.msra.mxu0 %v405
        %477 = vmatprep.mubr.bf16.mxu0 %v274
        %478 = vmatmul.mubr.bf16.gmra.mxu0 %v273
        %v479 = vpop.f32.mrf.mxu0
        %v480 = vadd.f32 %v300, %v479
        %v481 = vpop.f32.mrf.mxu0
        %v482 = vpop.f32.mrf.mxu0
        %v483 = vadd.f32 %v300, %v482
        %v484 = vpop.f32.mrf.mxu0
        %485 = vmatprep.mubr.bf16.mxu0 %v277
        %486 = vmatmul.mubr.bf16.gmra.mxu0 %v276
        %v487 = vpop.f32.mrf.mxu0
        %v488 = vadd.f32 %v300, %v487
        %v489 = vpop.f32.mrf.mxu0
        %v490 = vpop.f32.mrf.mxu0
        %v491 = vadd.f32 %v300, %v490
        %v492 = vpop.f32.mrf.mxu0
        %493 = vmatprep.mubr.bf16.mxu0 %v280
        %494 = vmatmul.mubr.bf16.gmra.mxu0 %v279
        %v495 = vpop.f32.mrf.mxu0
        %v496 = vadd.f32 %v300, %v495
        %v497 = vpop.f32.mrf.mxu0
        %v498 = vpop.f32.mrf.mxu0
        %v499 = vadd.f32 %v300, %v498
        %v500 = vpop.f32.mrf.mxu0
        %501 = vmatprep.mubr.bf16.mxu0 %v283
        %502 = vmatmul.mubr.bf16.gmra.mxu0 %v282
        %v503 = vpop.f32.mrf.mxu0
        %v504 = vadd.f32 %v300, %v503
        %v505 = vpop.f32.mrf.mxu0
        %v506 = vpop.f32.mrf.mxu0
        %v507 = vadd.f32 %v300, %v506
        %v508 = vpop.f32.mrf.mxu0
        %509 = vmatprep.mubr.bf16.mxu0 %v286
        %510 = vmatmul.mubr.bf16.gmra.mxu0 %v285
        %v511 = vpop.f32.mrf.mxu0
        %v512 = vadd.f32 %v300, %v511
        %v513 = vpop.f32.mrf.mxu0
        %v514 = vpop.f32.mrf.mxu0
        %v515 = vadd.f32 %v300, %v514
        %v516 = vpop.f32.mrf.mxu0
        %517 = vmatprep.mubr.bf16.mxu0 %v289
        %518 = vmatmul.mubr.bf16.gmra.mxu0 %v288
        %v519 = vpop.f32.mrf.mxu0
        %v520 = vadd.f32 %v300, %v519
        %v521 = vpop.f32.mrf.mxu0
        %v522 = vpop.f32.mrf.mxu0
        %v523 = vadd.f32 %v300, %v522
        %v524 = vpop.f32.mrf.mxu0
        %525 = vmatprep.mubr.bf16.mxu0 %v292
        %526 = vmatmul.mubr.bf16.gmra.mxu0 %v291
        %v527 = vpop.f32.mrf.mxu0
        %v528 = vadd.f32 %v300, %v527
        %v529 = vpop.f32.mrf.mxu0
        %v530 = vpop.f32.mrf.mxu0
        %v531 = vadd.f32 %v300, %v530
        %v532 = vpop.f32.mrf.mxu0
        %533 = vmatprep.mubr.bf16.mxu0 %v295
        %534 = vmatmul.mubr.bf16.gmra.mxu0 %v294
        %v535 = vpop.f32.mrf.mxu0
        %v536 = vadd.f32 %v300, %v535
        %v537 = vpop.f32.mrf.mxu0
        %v538 = vpop.f32.mrf.mxu0
        %v539 = vadd.f32 %v300, %v538
        %v540 = vpop.f32.mrf.mxu0
        %541 = vdwg.mxu0
        %542 = vmatprep.subr.bf16.mxu0 0
        %543 = vmatpush1.bf16.msra.mxu0 %v420
        %544 = vmatprep.subr.bf16.mxu0 0
        %545 = vmatpush1.bf16.msra.mxu0 %v419
        %546 = vmatprep.subr.bf16.mxu0 0
        %547 = vmatpush1.bf16.msra.mxu0 %v418
        %548 = vmatprep.subr.bf16.mxu0 0
        %549 = vmatpush1.bf16.msra.mxu0 %v417
        %550 = vmatprep.subr.bf16.mxu0 0
        %551 = vmatpush1.bf16.msra.mxu0 %v416
        %552 = vmatprep.subr.bf16.mxu0 0
        %553 = vmatpush1.bf16.msra.mxu0 %v415
        %554 = vmatprep.subr.bf16.mxu0 0
        %555 = vmatpush1.bf16.msra.mxu0 %v414
        %556 = vmatprep.subr.bf16.mxu0 0
        %557 = vmatpush1.bf16.msra.mxu0 %v413
        %558 = vmatprep.subr.bf16.mxu0 0
        %559 = vmatpush2.bf16.msra.mxu0 0
        %560 = vmatprep.subr.bf16.mxu0 0
        %561 = vmatpush2.bf16.msra.mxu0 0
        %562 = vmatprep.subr.bf16.mxu0 0
        %563 = vmatpush2.bf16.msra.mxu0 0
        %564 = vmatprep.subr.bf16.mxu0 0
        %565 = vmatpush2.bf16.msra.mxu0 0
        %566 = vmatprep.subr.bf16.mxu0 0
        %567 = vmatpush2.bf16.msra.mxu0 0
        %568 = vmatprep.subr.bf16.mxu0 0
        %569 = vmatpush2.bf16.msra.mxu0 0
        %570 = vmatprep.subr.bf16.mxu0 0
        %571 = vmatpush2.bf16.msra.mxu0 0
        %572 = vmatprep.subr.bf16.mxu0 0
        %573 = vmatpush2.bf16.msra.mxu0 0
        %574 = vmatprep.mubr.bf16.mxu0 0
        %575 = vmatmul.mubr.bf16.gmra.mxu0 %v275
        %v576 = vpop.f32.mrf.mxu0
        %v577 = vadd.f32 %v480, %v576
        %v578 = vpop.f32.mrf.mxu0
        %v579 = vpop.f32.mrf.mxu0
        %v580 = vadd.f32 %v483, %v579
        %v581 = vpop.f32.mrf.mxu0
        %582 = vmatprep.mubr.bf16.mxu0 0
        %583 = vmatmul.mubr.bf16.gmra.mxu0 %v278
        %v584 = vpop.f32.mrf.mxu0
        %v585 = vadd.f32 %v488, %v584
        %v586 = vpop.f32.mrf.mxu0
        %v587 = vpop.f32.mrf.mxu0
        %v588 = vadd.f32 %v491, %v587
        %v589 = vpop.f32.mrf.mxu0
        %590 = vmatprep.mubr.bf16.mxu0 0
        %591 = vmatmul.mubr.bf16.gmra.mxu0 %v281
        %v592 = vpop.f32.mrf.mxu0
        %v593 = vadd.f32 %v496, %v592
        %v594 = vpop.f32.mrf.mxu0
        %v595 = vpop.f32.mrf.mxu0
        %v596 = vadd.f32 %v499, %v595
        %v597 = vpop.f32.mrf.mxu0
        %598 = vmatprep.mubr.bf16.mxu0 0
        %599 = vmatmul.mubr.bf16.gmra.mxu0 %v284
        %v600 = vpop.f32.mrf.mxu0
        %v601 = vadd.f32 %v504, %v600
        %v602 = vpop.f32.mrf.mxu0
        %v603 = vpop.f32.mrf.mxu0
        %v604 = vadd.f32 %v507, %v603
        %v605 = vpop.f32.mrf.mxu0
        %606 = vmatprep.mubr.bf16.mxu0 0
        %607 = vmatmul.mubr.bf16.gmra.mxu0 %v287
        %v608 = vpop.f32.mrf.mxu0
        %v609 = vadd.f32 %v512, %v608
        %v610 = vpop.f32.mrf.mxu0
        %v611 = vpop.f32.mrf.mxu0
        %v612 = vadd.f32 %v515, %v611
        %v613 = vpop.f32.mrf.mxu0
        %614 = vmatprep.mubr.bf16.mxu0 0
        %615 = vmatmul.mubr.bf16.gmra.mxu0 %v290
        %v616 = vpop.f32.mrf.mxu0
        %v617 = vadd.f32 %v520, %v616
        %v618 = vpop.f32.mrf.mxu0
        %v619 = vpop.f32.mrf.mxu0
        %v620 = vadd.f32 %v523, %v619
        %v621 = vpop.f32.mrf.mxu0
        %622 = vmatprep.mubr.bf16.mxu0 0
        %623 = vmatmul.mubr.bf16.gmra.mxu0 %v293
        %v624 = vpop.f32.mrf.mxu0
        %v625 = vadd.f32 %v528, %v624
        %v626 = vpop.f32.mrf.mxu0
        %v627 = vpop.f32.mrf.mxu0
        %v628 = vadd.f32 %v531, %v627
        %v629 = vpop.f32.mrf.mxu0
        %630 = vmatprep.mubr.bf16.mxu0 0
        %631 = vmatmul.mubr.bf16.gmra.mxu0 %v296
        %v632 = vpop.f32.mrf.mxu0
        %v633 = vadd.f32 %v536, %v632
        %v634 = vpop.f32.mrf.mxu0
        %v635 = vpop.f32.mrf.mxu0
        %v636 = vadd.f32 %v539, %v635
        %v637 = vpop.f32.mrf.mxu0
        %638 = vdwg.mxu0
        %v639 = vmax.f32 %v577, 0.0
        %v640 = vmax.f32 %v580, 0.0
        %v641 = vmax.f32 %v585, 0.0
        %v642 = vmax.f32 %v588, 0.0
        %v643 = vmax.f32 %v593, 0.0
        %v644 = vmax.f32 %v596, 0.0
        %v645 = vmax.f32 %v601, 0.0
        %v646 = vmax.f32 %v604, 0.0
        %v647 = vmax.f32 %v609, 0.0
        %v648 = vmax.f32 %v612, 0.0
        %v649 = vmax.f32 %v617, 0.0
        %v650 = vmax.f32 %v620, 0.0
        %v651 = vmax.f32 %v625, 0.0
        %v652 = vmax.f32 %v628, 0.0
        %v653 = vmax.f32 %v633, 0.0
        %v654 = vmax.f32 %v636, 0.0
        %v655 = vld [vmem:[%s1 + $0x240] sm:$0xff]
        %v656 = vld [vmem:[%s1 + $0x24c] sm:$0xff]
        %v657 = vld [vmem:[%s1 + $0x258] sm:$0xff]
        %v658 = vld [vmem:[%s1 + $0x264] sm:$0xff]
        %v659 = vld [vmem:[%s1 + $0x270] sm:$0xff]
        %v660 = vld [vmem:[%s1 + $0x27c] sm:$0xff]
        %v661 = vld [vmem:[%s1 + $0x288] sm:$0xff]
        %v662 = vld [vmem:[%s1 + $0x294] sm:$0xff]
        %v663 = vld [vmem:[%s1 + $0x2a0] sm:$0xff]
        %v664 = vld [vmem:[%s1 + $0x2ac] sm:$0xff]
        %v665 = vld [vmem:[%s1 + $0x2b8] sm:$0xff]
        %v666 = vld [vmem:[%s1 + $0x2c4] sm:$0xff]
        %v667 = vld [vmem:[%s1 + $0x2d0] sm:$0xff]
        %v668 = vld [vmem:[%s1 + $0x2dc] sm:$0xff]
        %v669 = vld [vmem:[%s1 + $0x2e8] sm:$0xff]
        %v670 = vld [vmem:[%s1 + $0x2f4] sm:$0xff]
        %s671 = scalar_lea.vmem %s2, 1
        %v672 = vld [vmem:[%s671] ss:$4 sm:$0x3]
        %v673 = vpack.c.bf16 %v640, %v639
        %v674 = vpack.c.bf16 %v642, %v641
        %v675 = vpack.c.bf16 %v644, %v643
        %v676 = vpack.c.bf16 %v646, %v645
        %v677 = vpack.c.bf16 %v648, %v647
        %v678 = vpack.c.bf16 %v650, %v649
        %v679 = vpack.c.bf16 %v652, %v651
        %v680 = vpack.c.bf16 %v654, %v653
        %v682 = vlaneseq
        %v683 = vshrl.u32 %v682, 7
        %v684 = vsub.s32 0, %v683
        %v685 = vrot.slane %v672, %v684
        %v686 = vlaneseq
        %v687 = vshrl.u32 %v686, 7
        %v688 = vsub.s32 1, %v687
        %v689 = vrot.slane %v672, %v688
        %v708 = vunpack.c.l.b16 %v655
        %v709 = vunpack.c.h.b16 %v655
        %v710 = vunpack.c.l.b16 %v656
        %v711 = vunpack.c.h.b16 %v656
        %v712 = vunpack.c.l.b16 %v657
        %v713 = vunpack.c.h.b16 %v657
        %v714 = vunpack.c.l.b16 %v658
        %v715 = vunpack.c.h.b16 %v658
        %v716 = vunpack.c.l.b16 %v659
        %v717 = vunpack.c.h.b16 %v659
        %v718 = vunpack.c.l.b16 %v660
        %v719 = vunpack.c.h.b16 %v660
        %v720 = vunpack.c.l.b16 %v661
        %v721 = vunpack.c.h.b16 %v661
        %v722 = vunpack.c.l.b16 %v662
        %v723 = vunpack.c.h.b16 %v662
        %v724 = vunpack.c.l.b16 %v663
        %v725 = vunpack.c.h.b16 %v663
        %v726 = vunpack.c.l.b16 %v664
        %v727 = vunpack.c.h.b16 %v664
        %v728 = vunpack.c.l.b16 %v665
        %v729 = vunpack.c.h.b16 %v665
        %v730 = vunpack.c.l.b16 %v666
        %v731 = vunpack.c.h.b16 %v666
        %v732 = vunpack.c.l.b16 %v667
        %v733 = vunpack.c.h.b16 %v667
        %v734 = vunpack.c.l.b16 %v668
        %v735 = vunpack.c.h.b16 %v668
        %v736 = vunpack.c.l.b16 %v669
        %v737 = vunpack.c.h.b16 %v669
        %v738 = vunpack.c.l.b16 %v670
        %v739 = vunpack.c.h.b16 %v670
        %v740 = vpack.c.b16 %v710, %v708
        %v741 = vpack.c.b16 %v711, %v709
        %v742 = vpack.c.b16 %v714, %v712
        %v743 = vpack.c.b16 %v715, %v713
        %v744 = vpack.c.b16 %v718, %v716
        %v745 = vpack.c.b16 %v719, %v717
        %v746 = vpack.c.b16 %v722, %v720
        %v747 = vpack.c.b16 %v723, %v721
        %v748 = vpack.c.b16 %v726, %v724
        %v749 = vpack.c.b16 %v727, %v725
        %v750 = vpack.c.b16 %v730, %v728
        %v751 = vpack.c.b16 %v731, %v729
        %v752 = vpack.c.b16 %v734, %v732
        %v753 = vpack.c.b16 %v735, %v733
        %v754 = vpack.c.b16 %v738, %v736
        %v755 = vpack.c.b16 %v739, %v737
        %772 = vmatprep.subr.bf16.mxu0 %v755
        %773 = vmatpush1.bf16.msra.mxu0 %v754
        %774 = vmatprep.subr.bf16.mxu0 %v753
        %775 = vmatpush1.bf16.msra.mxu0 %v752
        %776 = vmatprep.subr.bf16.mxu0 %v751
        %777 = vmatpush1.bf16.msra.mxu0 %v750
        %778 = vmatprep.subr.bf16.mxu0 %v749
        %779 = vmatpush1.bf16.msra.mxu0 %v748
        %780 = vmatprep.subr.bf16.mxu0 %v747
        %781 = vmatpush1.bf16.msra.mxu0 %v746
        %782 = vmatprep.subr.bf16.mxu0 %v745
        %783 = vmatpush1.bf16.msra.mxu0 %v744
        %784 = vmatprep.subr.bf16.mxu0 %v743
        %785 = vmatpush1.bf16.msra.mxu0 %v742
        %786 = vmatprep.subr.bf16.mxu0 %v741
        %787 = vmatpush1.bf16.msra.mxu0 %v740
        %788 = vmatprep.subr.bf16.mxu0 0
        %789 = vmatpush2.bf16.msra.mxu0 0
        %790 = vmatprep.subr.bf16.mxu0 0
        %791 = vmatpush2.bf16.msra.mxu0 0
        %792 = vmatprep.subr.bf16.mxu0 0
        %793 = vmatpush2.bf16.msra.mxu0 0
        %794 = vmatprep.subr.bf16.mxu0 0
        %795 = vmatpush2.bf16.msra.mxu0 0
        %796 = vmatprep.subr.bf16.mxu0 0
        %797 = vmatpush2.bf16.msra.mxu0 0
        %798 = vmatprep.subr.bf16.mxu0 0
        %799 = vmatpush2.bf16.msra.mxu0 0
        %800 = vmatprep.subr.bf16.mxu0 0
        %801 = vmatpush2.bf16.msra.mxu0 0
        %802 = vmatprep.subr.bf16.mxu0 0
        %803 = vmatpush2.bf16.msra.mxu0 0
        %804 = vmatprep.mubr.bf16.mxu0 0
        %805 = vmatmul.mubr.bf16.gmra.mxu0 %v673
        %v806 = vpop.f32.mrf.mxu0
        %v807 = vadd.f32 %v685, %v806
        %v808 = vpop.f32.mrf.mxu0
        %v809 = vadd.f32 %v689, %v808
        %v810 = vpop.f32.mrf.mxu0
        %v811 = vadd.f32 %v685, %v810
        %v812 = vpop.f32.mrf.mxu0
        %v813 = vadd.f32 %v689, %v812
        %814 = vmatprep.mubr.bf16.mxu0 0
        %815 = vmatmul.mubr.bf16.gmra.mxu0 %v674
        %v816 = vpop.f32.mrf.mxu0
        %v817 = vadd.f32 %v685, %v816
        %v818 = vpop.f32.mrf.mxu0
        %v819 = vadd.f32 %v689, %v818
        %v820 = vpop.f32.mrf.mxu0
        %v821 = vadd.f32 %v685, %v820
        %v822 = vpop.f32.mrf.mxu0
        %v823 = vadd.f32 %v689, %v822
        %824 = vmatprep.mubr.bf16.mxu0 0
        %825 = vmatmul.mubr.bf16.gmra.mxu0 %v675
        %v826 = vpop.f32.mrf.mxu0
        %v827 = vadd.f32 %v685, %v826
        %v828 = vpop.f32.mrf.mxu0
        %v829 = vadd.f32 %v689, %v828
        %v830 = vpop.f32.mrf.mxu0
        %v831 = vadd.f32 %v685, %v830
        %v832 = vpop.f32.mrf.mxu0
        %v833 = vadd.f32 %v689, %v832
        %834 = vmatprep.mubr.bf16.mxu0 0
        %835 = vmatmul.mubr.bf16.gmra.mxu0 %v676
        %v836 = vpop.f32.mrf.mxu0
        %v837 = vadd.f32 %v685, %v836
        %v838 = vpop.f32.mrf.mxu0
        %v839 = vadd.f32 %v689, %v838
        %v840 = vpop.f32.mrf.mxu0
        %v841 = vadd.f32 %v685, %v840
        %v842 = vpop.f32.mrf.mxu0
        %v843 = vadd.f32 %v689, %v842
        %844 = vmatprep.mubr.bf16.mxu0 0
        %845 = vmatmul.mubr.bf16.gmra.mxu0 %v677
        %v846 = vpop.f32.mrf.mxu0
        %v847 = vadd.f32 %v685, %v846
        %v848 = vpop.f32.mrf.mxu0
        %v849 = vadd.f32 %v689, %v848
        %v850 = vpop.f32.mrf.mxu0
        %v851 = vadd.f32 %v685, %v850
        %v852 = vpop.f32.mrf.mxu0
        %v853 = vadd.f32 %v689, %v852
        %854 = vmatprep.mubr.bf16.mxu0 0
        %855 = vmatmul.mubr.bf16.gmra.mxu0 %v678
        %v856 = vpop.f32.mrf.mxu0
        %v857 = vadd.f32 %v685, %v856
        %v858 = vpop.f32.mrf.mxu0
        %v859 = vadd.f32 %v689, %v858
        %v860 = vpop.f32.mrf.mxu0
        %v861 = vadd.f32 %v685, %v860
        %v862 = vpop.f32.mrf.mxu0
        %v863 = vadd.f32 %v689, %v862
        %864 = vmatprep.mubr.bf16.mxu0 0
        %865 = vmatmul.mubr.bf16.gmra.mxu0 %v679
        %v866 = vpop.f32.mrf.mxu0
        %v867 = vadd.f32 %v685, %v866
        %v868 = vpop.f32.mrf.mxu0
        %v869 = vadd.f32 %v689, %v868
        %v870 = vpop.f32.mrf.mxu0
        %v871 = vadd.f32 %v685, %v870
        %v872 = vpop.f32.mrf.mxu0
        %v873 = vadd.f32 %v689, %v872
        %874 = vmatprep.mubr.bf16.mxu0 0
        %875 = vmatmul.mubr.bf16.gmra.mxu0 %v680
        %v876 = vpop.f32.mrf.mxu0
        %v877 = vadd.f32 %v685, %v876
        %v878 = vpop.f32.mrf.mxu0
        %v879 = vadd.f32 %v689, %v878
        %v880 = vpop.f32.mrf.mxu0
        %v881 = vadd.f32 %v685, %v880
        %v882 = vpop.f32.mrf.mxu0
        %v883 = vadd.f32 %v689, %v882
        %884 = vdwg.mxu0
        %v885 = vmax.f32 %v807, 0.0
        %v886 = vmax.f32 %v809, 0.0
        %v887 = vmax.f32 %v811, 0.0
        %v888 = vmax.f32 %v813, 0.0
        %v889 = vmax.f32 %v817, 0.0
        %v890 = vmax.f32 %v819, 0.0
        %v891 = vmax.f32 %v821, 0.0
        %v892 = vmax.f32 %v823, 0.0
        %v893 = vmax.f32 %v827, 0.0
        %v894 = vmax.f32 %v829, 0.0
        %v895 = vmax.f32 %v831, 0.0
        %v896 = vmax.f32 %v833, 0.0
        %v897 = vmax.f32 %v837, 0.0
        %v898 = vmax.f32 %v839, 0.0
        %v899 = vmax.f32 %v841, 0.0
        %v900 = vmax.f32 %v843, 0.0
        %v901 = vmax.f32 %v847, 0.0
        %v902 = vmax.f32 %v849, 0.0
        %v903 = vmax.f32 %v851, 0.0
        %v904 = vmax.f32 %v853, 0.0
        %v905 = vmax.f32 %v857, 0.0
        %v906 = vmax.f32 %v859, 0.0
        %v907 = vmax.f32 %v861, 0.0
        %v908 = vmax.f32 %v863, 0.0
        %v909 = vmax.f32 %v867, 0.0
        %v910 = vmax.f32 %v869, 0.0
        %v911 = vmax.f32 %v871, 0.0
        %v912 = vmax.f32 %v873, 0.0
        %v913 = vmax.f32 %v877, 0.0
        %v914 = vmax.f32 %v879, 0.0
        %v915 = vmax.f32 %v881, 0.0
        %v916 = vmax.f32 %v883, 0.0
        %v917 = vld [vmem:[%s1 + $0x300] sm:$0xff]
        %v918 = vld [vmem:[%s1 + $0x308] sm:$0xf]
        %v919 = vld [vmem:[%s1 + $0x30c] sm:$0xff]
        %v920 = vld [vmem:[%s1 + $0x314] sm:$0xf]
        %v921 = vld [vmem:[%s1 + $0x318] sm:$0xff]
        %v922 = vld [vmem:[%s1 + $0x320] sm:$0xf]
        %v923 = vld [vmem:[%s1 + $0x324] sm:$0xff]
        %v924 = vld [vmem:[%s1 + $0x32c] sm:$0xf]
        %v925 = vld [vmem:[%s1 + $0x330] sm:$0xff]
        %v926 = vld [vmem:[%s1 + $0x338] sm:$0xf]
        %v927 = vld [vmem:[%s1 + $0x33c] sm:$0xff]
        %v928 = vld [vmem:[%s1 + $0x344] sm:$0xf]
        %v929 = vld [vmem:[%s1 + $0x348] sm:$0xff]
        %v930 = vld [vmem:[%s1 + $0x350] sm:$0xf]
        %v931 = vld [vmem:[%s1 + $0x354] sm:$0xff]
        %v932 = vld [vmem:[%s1 + $0x35c] sm:$0xf]
        %v933 = vld [vmem:[%s1 + $0x360] sm:$0xff]
        %v934 = vld [vmem:[%s1 + $0x368] sm:$0xf]
        %v935 = vld [vmem:[%s1 + $0x36c] sm:$0xff]
        %v936 = vld [vmem:[%s1 + $0x374] sm:$0xf]
        %v937 = vld [vmem:[%s1 + $0x378] sm:$0xff]
        %v938 = vld [vmem:[%s1 + $0x380] sm:$0xf]
        %v939 = vld [vmem:[%s1 + $0x384] sm:$0xff]
        %v940 = vld [vmem:[%s1 + $0x38c] sm:$0xf]
        %v941 = vld [vmem:[%s1 + $0x390] sm:$0xff]
        %v942 = vld [vmem:[%s1 + $0x398] sm:$0xf]
        %v943 = vld [vmem:[%s1 + $0x39c] sm:$0xff]
        %v944 = vld [vmem:[%s1 + $0x3a4] sm:$0xf]
        %v945 = vld [vmem:[%s1 + $0x3a8] sm:$0xff]
        %v946 = vld [vmem:[%s1 + $0x3b0] sm:$0xf]
        %v947 = vld [vmem:[%s1 + $0x3b4] sm:$0xff]
        %v948 = vld [vmem:[%s1 + $0x3bc] sm:$0xf]
        %v949 = vld [vmem:[%s1 + $0x3c0] sm:$0xff]
        %v950 = vld [vmem:[%s1 + $0x3c8] sm:$0xf]
        %v951 = vld [vmem:[%s1 + $0x3cc] sm:$0xff]
        %v952 = vld [vmem:[%s1 + $0x3d4] sm:$0xf]
        %v953 = vld [vmem:[%s1 + $0x3d8] sm:$0xff]
        %v954 = vld [vmem:[%s1 + $0x3e0] sm:$0xf]
        %v955 = vld [vmem:[%s1 + $0x3e4] sm:$0xff]
        %v956 = vld [vmem:[%s1 + $0x3ec] sm:$0xf]
        %v957 = vld [vmem:[%s1 + $0x3f0] sm:$0xff]
        %v958 = vld [vmem:[%s1 + $0x3f8] sm:$0xf]
        %v959 = vld [vmem:[%s1 + $0x3fc] sm:$0xff]
        %v960 = vld [vmem:[%s1 + $0x404] sm:$0xf]
        %v961 = vld [vmem:[%s1 + $0x408] sm:$0xff]
        %v962 = vld [vmem:[%s1 + $0x410] sm:$0xf]
        %v963 = vld [vmem:[%s1 + $0x414] sm:$0xff]
        %v964 = vld [vmem:[%s1 + $0x41c] sm:$0xf]
        %v965 = vld [vmem:[%s1 + $0x420] sm:$0xff]
        %v966 = vld [vmem:[%s1 + $0x428] sm:$0xf]
        %v967 = vld [vmem:[%s1 + $0x42c] sm:$0xff]
        %v968 = vld [vmem:[%s1 + $0x434] sm:$0xf]
        %v969 = vld [vmem:[%s1 + $0x438] sm:$0xff]
        %v970 = vld [vmem:[%s1 + $0x440] sm:$0xf]
        %v971 = vld [vmem:[%s1 + $0x444] sm:$0xff]
        %v972 = vld [vmem:[%s1 + $0x44c] sm:$0xf]
        %v973 = vld [vmem:[%s1 + $0x450] sm:$0xff]
        %v974 = vld [vmem:[%s1 + $0x458] sm:$0xf]
        %v975 = vld [vmem:[%s1 + $0x45c] sm:$0xff]
        %v976 = vld [vmem:[%s1 + $0x464] sm:$0xf]
        %v977 = vld [vmem:[%s1 + $0x468] sm:$0xff]
        %v978 = vld [vmem:[%s1 + $0x470] sm:$0xf]
        %v979 = vld [vmem:[%s1 + $0x474] sm:$0xff]
        %v980 = vld [vmem:[%s1 + $0x47c] sm:$0xf]
        %s981 = scalar_lea.vmem %s2, 2
        %v982 = vld [vmem:[%s981] ss:$4 sm:$0x7]
        %v983 = vpack.c.bf16 %v887, %v885
        %v984 = vpack.c.bf16 %v888, %v886
        %v985 = vpack.c.bf16 %v891, %v889
        %v986 = vpack.c.bf16 %v892, %v890
        %v987 = vpack.c.bf16 %v895, %v893
        %v988 = vpack.c.bf16 %v896, %v894
        %v989 = vpack.c.bf16 %v899, %v897
        %v990 = vpack.c.bf16 %v900, %v898
        %v991 = vpack.c.bf16 %v903, %v901
        %v992 = vpack.c.bf16 %v904, %v902
        %v993 = vpack.c.bf16 %v907, %v905
        %v994 = vpack.c.bf16 %v908, %v906
        %v995 = vpack.c.bf16 %v911, %v909
        %v996 = vpack.c.bf16 %v912, %v910
        %v997 = vpack.c.bf16 %v915, %v913
        %v998 = vpack.c.bf16 %v916, %v914
        %v1000 = vlaneseq
        %v1001 = vshrl.u32 %v1000, 7
        %v1002 = vsub.s32 0, %v1001
        %v1003 = vrot.slane %v982, %v1002
        %v1004 = vlaneseq
        %v1005 = vshrl.u32 %v1004, 7
        %v1006 = vsub.s32 1, %v1005
        %v1007 = vrot.slane %v982, %v1006
        %v1008 = vlaneseq
        %v1009 = vshrl.u32 %v1008, 7
        %v1010 = vsub.s32 2, %v1009
        %v1011 = vrot.slane %v982, %v1010
        %v1079 = vunpack.c.l.b16 %v917
        %v1080 = vunpack.c.h.b16 %v917
        %v1081 = vunpack.c.l.b16 %v918
        %v1082 = vunpack.c.l.b16 %v919
        %v1083 = vunpack.c.h.b16 %v919
        %v1084 = vunpack.c.l.b16 %v920
        %v1085 = vunpack.c.l.b16 %v921
        %v1086 = vunpack.c.h.b16 %v921
        %v1087 = vunpack.c.l.b16 %v922
        %v1088 = vunpack.c.l.b16 %v923
        %v1089 = vunpack.c.h.b16 %v923
        %v1090 = vunpack.c.l.b16 %v924
        %v1091 = vunpack.c.l.b16 %v925
        %v1092 = vunpack.c.h.b16 %v925
        %v1093 = vunpack.c.l.b16 %v926
        %v1094 = vunpack.c.l.b16 %v927
        %v1095 = vunpack.c.h.b16 %v927
        %v1096 = vunpack.c.l.b16 %v928
        %v1097 = vunpack.c.l.b16 %v929
        %v1098 = vunpack.c.h.b16 %v929
        %v1099 = vunpack.c.l.b16 %v930
        %v1100 = vunpack.c.l.b16 %v931
        %v1101 = vunpack.c.h.b16 %v931
        %v1102 = vunpack.c.l.b16 %v932
        %v1103 = vunpack.c.l.b16 %v933
        %v1104 = vunpack.c.h.b16 %v933
        %v1105 = vunpack.c.l.b16 %v934
        %v1106 = vunpack.c.l.b16 %v935
        %v1107 = vunpack.c.h.b16 %v935
        %v1108 = vunpack.c.l.b16 %v936
        %v1109 = vunpack.c.l.b16 %v937
        %v1110 = vunpack.c.h.b16 %v937
        %v1111 = vunpack.c.l.b16 %v938
        %v1112 = vunpack.c.l.b16 %v939
        %v1113 = vunpack.c.h.b16 %v939
        %v1114 = vunpack.c.l.b16 %v940
        %v1115 = vunpack.c.l.b16 %v941
        %v1116 = vunpack.c.h.b16 %v941
        %v1117 = vunpack.c.l.b16 %v942
        %v1118 = vunpack.c.l.b16 %v943
        %v1119 = vunpack.c.h.b16 %v943
        %v1120 = vunpack.c.l.b16 %v944
        %v1121 = vunpack.c.l.b16 %v945
        %v1122 = vunpack.c.h.b16 %v945
        %v1123 = vunpack.c.l.b16 %v946
        %v1124 = vunpack.c.l.b16 %v947
        %v1125 = vunpack.c.h.b16 %v947
        %v1126 = vunpack.c.l.b16 %v948
        %v1127 = vunpack.c.l.b16 %v949
        %v1128 = vunpack.c.h.b16 %v949
        %v1129 = vunpack.c.l.b16 %v950
        %v1130 = vunpack.c.l.b16 %v951
        %v1131 = vunpack.c.h.b16 %v951
        %v1132 = vunpack.c.l.b16 %v952
        %v1133 = vunpack.c.l.b16 %v953
        %v1134 = vunpack.c.h.b16 %v953
        %v1135 = vunpack.c.l.b16 %v954
        %v1136 = vunpack.c.l.b16 %v955
        %v1137 = vunpack.c.h.b16 %v955
        %v1138 = vunpack.c.l.b16 %v956
        %v1139 = vunpack.c.l.b16 %v957
        %v1140 = vunpack.c.h.b16 %v957
        %v1141 = vunpack.c.l.b16 %v958
        %v1142 = vunpack.c.l.b16 %v959
        %v1143 = vunpack.c.h.b16 %v959
        %v1144 = vunpack.c.l.b16 %v960
        %v1145 = vunpack.c.l.b16 %v961
        %v1146 = vunpack.c.h.b16 %v961
        %v1147 = vunpack.c.l.b16 %v962
        %v1148 = vunpack.c.l.b16 %v963
        %v1149 = vunpack.c.h.b16 %v963
        %v1150 = vunpack.c.l.b16 %v964
        %v1151 = vunpack.c.l.b16 %v965
        %v1152 = vunpack.c.h.b16 %v965
        %v1153 = vunpack.c.l.b16 %v966
        %v1154 = vunpack.c.l.b16 %v967
        %v1155 = vunpack.c.h.b16 %v967
        %v1156 = vunpack.c.l.b16 %v968
        %v1157 = vunpack.c.l.b16 %v969
        %v1158 = vunpack.c.h.b16 %v969
        %v1159 = vunpack.c.l.b16 %v970
        %v1160 = vunpack.c.l.b16 %v971
        %v1161 = vunpack.c.h.b16 %v971
        %v1162 = vunpack.c.l.b16 %v972
        %v1163 = vunpack.c.l.b16 %v973
        %v1164 = vunpack.c.h.b16 %v973
        %v1165 = vunpack.c.l.b16 %v974
        %v1166 = vunpack.c.l.b16 %v975
        %v1167 = vunpack.c.h.b16 %v975
        %v1168 = vunpack.c.l.b16 %v976
        %v1169 = vunpack.c.l.b16 %v977
        %v1170 = vunpack.c.h.b16 %v977
        %v1171 = vunpack.c.l.b16 %v978
        %v1172 = vunpack.c.l.b16 %v979
        %v1173 = vunpack.c.h.b16 %v979
        %v1174 = vunpack.c.l.b16 %v980
        %v1175 = vpack.c.b16 %v1082, %v1079
        %v1176 = vpack.c.b16 %v1083, %v1080
        %v1177 = vpack.c.b16 %v1084, %v1081
        %v1178 = vpack.c.b16 %v1088, %v1085
        %v1179 = vpack.c.b16 %v1089, %v1086
        %v1180 = vpack.c.b16 %v1090, %v1087
        %v1181 = vpack.c.b16 %v1094, %v1091
        %v1182 = vpack.c.b16 %v1095, %v1092
        %v1183 = vpack.c.b16 %v1096, %v1093
        %v1184 = vpack.c.b16 %v1100, %v1097
        %v1185 = vpack.c.b16 %v1101, %v1098
        %v1186 = vpack.c.b16 %v1102, %v1099
        %v1187 = vpack.c.b16 %v1106, %v1103
        %v1188 = vpack.c.b16 %v1107, %v1104
        %v1189 = vpack.c.b16 %v1108, %v1105
        %v1190 = vpack.c.b16 %v1112, %v1109
        %v1191 = vpack.c.b16 %v1113, %v1110
        %v1192 = vpack.c.b16 %v1114, %v1111
        %v1193 = vpack.c.b16 %v1118, %v1115
        %v1194 = vpack.c.b16 %v1119, %v1116
        %v1195 = vpack.c.b16 %v1120, %v1117
        %v1196 = vpack.c.b16 %v1124, %v1121
        %v1197 = vpack.c.b16 %v1125, %v1122
        %v1198 = vpack.c.b16 %v1126, %v1123
        %v1199 = vpack.c.b16 %v1130, %v1127
        %v1200 = vpack.c.b16 %v1131, %v1128
        %v1201 = vpack.c.b16 %v1132, %v1129
        %v1202 = vpack.c.b16 %v1136, %v1133
        %v1203 = vpack.c.b16 %v1137, %v1134
        %v1204 = vpack.c.b16 %v1138, %v1135
        %v1205 = vpack.c.b16 %v1142, %v1139
        %v1206 = vpack.c.b16 %v1143, %v1140
        %v1207 = vpack.c.b16 %v1144, %v1141
        %v1208 = vpack.c.b16 %v1148, %v1145
        %v1209 = vpack.c.b16 %v1149, %v1146
        %v1210 = vpack.c.b16 %v1150, %v1147
        %v1211 = vpack.c.b16 %v1154, %v1151
        %v1212 = vpack.c.b16 %v1155, %v1152
        %v1213 = vpack.c.b16 %v1156, %v1153
        %v1214 = vpack.c.b16 %v1160, %v1157
        %v1215 = vpack.c.b16 %v1161, %v1158
        %v1216 = vpack.c.b16 %v1162, %v1159
        %v1217 = vpack.c.b16 %v1166, %v1163
        %v1218 = vpack.c.b16 %v1167, %v1164
        %v1219 = vpack.c.b16 %v1168, %v1165
        %v1220 = vpack.c.b16 %v1172, %v1169
        %v1221 = vpack.c.b16 %v1173, %v1170
        %v1222 = vpack.c.b16 %v1174, %v1171
        %1271 = vmatprep.subr.bf16.mxu0 %v1197
        %1272 = vmatpush1.bf16.msra.mxu0 %v1196
        %1273 = vmatprep.subr.bf16.mxu0 %v1194
        %1274 = vmatpush1.bf16.msra.mxu0 %v1193
        %1275 = vmatprep.subr.bf16.mxu0 %v1191
        %1276 = vmatpush1.bf16.msra.mxu0 %v1190
        %1277 = vmatprep.subr.bf16.mxu0 %v1188
        %1278 = vmatpush1.bf16.msra.mxu0 %v1187
        %1279 = vmatprep.subr.bf16.mxu0 %v1185
        %1280 = vmatpush1.bf16.msra.mxu0 %v1184
        %1281 = vmatprep.subr.bf16.mxu0 %v1182
        %1282 = vmatpush1.bf16.msra.mxu0 %v1181
        %1283 = vmatprep.subr.bf16.mxu0 %v1179
        %1284 = vmatpush1.bf16.msra.mxu0 %v1178
        %1285 = vmatprep.subr.bf16.mxu0 %v1176
        %1286 = vmatpush1.bf16.msra.mxu0 %v1175
        %1287 = vmatprep.subr.bf16.mxu0 %v1221
        %1288 = vmatpush2.bf16.msra.mxu0 %v1220
        %1289 = vmatprep.subr.bf16.mxu0 %v1218
        %1290 = vmatpush2.bf16.msra.mxu0 %v1217
        %1291 = vmatprep.subr.bf16.mxu0 %v1215
        %1292 = vmatpush2.bf16.msra.mxu0 %v1214
        %1293 = vmatprep.subr.bf16.mxu0 %v1212
        %1294 = vmatpush2.bf16.msra.mxu0 %v1211
        %1295 = vmatprep.subr.bf16.mxu0 %v1209
        %1296 = vmatpush2.bf16.msra.mxu0 %v1208
        %1297 = vmatprep.subr.bf16.mxu0 %v1206
        %1298 = vmatpush2.bf16.msra.mxu0 %v1205
        %1299 = vmatprep.subr.bf16.mxu0 %v1203
        %1300 = vmatpush2.bf16.msra.mxu0 %v1202
        %1301 = vmatprep.subr.bf16.mxu0 %v1200
        %1302 = vmatpush2.bf16.msra.mxu0 %v1199
        %1303 = vmatprep.mubr.bf16.mxu0 %v984
        %1304 = vmatmul.mubr.bf16.gmra.mxu0 %v983
        %v1305 = vpop.f32.mrf.mxu0
        %v1306 = vadd.f32 %v1003, %v1305
        %v1307 = vpop.f32.mrf.mxu0
        %v1308 = vadd.f32 %v1007, %v1307
        %v1309 = vpop.f32.mrf.mxu0
        %v1310 = vadd.f32 %v1003, %v1309
        %v1311 = vpop.f32.mrf.mxu0
        %v1312 = vadd.f32 %v1007, %v1311
        %1313 = vmatprep.mubr.bf16.mxu0 %v986
        %1314 = vmatmul.mubr.bf16.gmra.mxu0 %v985
        %v1315 = vpop.f32.mrf.mxu0
        %v1316 = vadd.f32 %v1003, %v1315
        %v1317 = vpop.f32.mrf.mxu0
        %v1318 = vadd.f32 %v1007, %v1317
        %v1319 = vpop.f32.mrf.mxu0
        %v1320 = vadd.f32 %v1003, %v1319
        %v1321 = vpop.f32.mrf.mxu0
        %v1322 = vadd.f32 %v1007, %v1321
        %1323 = vmatprep.mubr.bf16.mxu0 %v988
        %1324 = vmatmul.mubr.bf16.gmra.mxu0 %v987
        %v1325 = vpop.f32.mrf.mxu0
        %v1326 = vadd.f32 %v1003, %v1325
        %v1327 = vpop.f32.mrf.mxu0
        %v1328 = vadd.f32 %v1007, %v1327
        %v1329 = vpop.f32.mrf.mxu0
        %v1330 = vadd.f32 %v1003, %v1329
        %v1331 = vpop.f32.mrf.mxu0
        %v1332 = vadd.f32 %v1007, %v1331
        %1333 = vmatprep.mubr.bf16.mxu0 %v990
        %1334 = vmatmul.mubr.bf16.gmra.mxu0 %v989
        %v1335 = vpop.f32.mrf.mxu0
        %v1336 = vadd.f32 %v1003, %v1335
        %v1337 = vpop.f32.mrf.mxu0
        %v1338 = vadd.f32 %v1007, %v1337
        %v1339 = vpop.f32.mrf.mxu0
        %v1340 = vadd.f32 %v1003, %v1339
        %v1341 = vpop.f32.mrf.mxu0
        %v1342 = vadd.f32 %v1007, %v1341
        %1343 = vmatprep.mubr.bf16.mxu0 %v992
        %1344 = vmatmul.mubr.bf16.gmra.mxu0 %v991
        %v1345 = vpop.f32.mrf.mxu0
        %v1346 = vadd.f32 %v1003, %v1345
        %v1347 = vpop.f32.mrf.mxu0
        %v1348 = vadd.f32 %v1007, %v1347
        %v1349 = vpop.f32.mrf.mxu0
        %v1350 = vadd.f32 %v1003, %v1349
        %v1351 = vpop.f32.mrf.mxu0
        %v1352 = vadd.f32 %v1007, %v1351
        %1353 = vmatprep.mubr.bf16.mxu0 %v994
        %1354 = vmatmul.mubr.bf16.gmra.mxu0 %v993
        %v1355 = vpop.f32.mrf.mxu0
        %v1356 = vadd.f32 %v1003, %v1355
        %v1357 = vpop.f32.mrf.mxu0
        %v1358 = vadd.f32 %v1007, %v1357
        %v1359 = vpop.f32.mrf.mxu0
        %v1360 = vadd.f32 %v1003, %v1359
        %v1361 = vpop.f32.mrf.mxu0
        %v1362 = vadd.f32 %v1007, %v1361
        %1363 = vmatprep.mubr.bf16.mxu0 %v996
        %1364 = vmatmul.mubr.bf16.gmra.mxu0 %v995
        %v1365 = vpop.f32.mrf.mxu0
        %v1366 = vadd.f32 %v1003, %v1365
        %v1367 = vpop.f32.mrf.mxu0
        %v1368 = vadd.f32 %v1007, %v1367
        %v1369 = vpop.f32.mrf.mxu0
        %v1370 = vadd.f32 %v1003, %v1369
        %v1371 = vpop.f32.mrf.mxu0
        %v1372 = vadd.f32 %v1007, %v1371
        %1373 = vmatprep.mubr.bf16.mxu0 %v998
        %1374 = vmatmul.mubr.bf16.gmra.mxu0 %v997
        %v1375 = vpop.f32.mrf.mxu0
        %v1376 = vadd.f32 %v1003, %v1375
        %v1377 = vpop.f32.mrf.mxu0
        %v1378 = vadd.f32 %v1007, %v1377
        %v1379 = vpop.f32.mrf.mxu0
        %v1380 = vadd.f32 %v1003, %v1379
        %v1381 = vpop.f32.mrf.mxu0
        %v1382 = vadd.f32 %v1007, %v1381
        %1383 = vdwg.mxu0
        %1384 = vmatprep.subr.bf16.mxu0 0
        %1385 = vmatpush1.bf16.msra.mxu0 %v1198
        %1386 = vmatprep.subr.bf16.mxu0 0
        %1387 = vmatpush1.bf16.msra.mxu0 %v1195
        %1388 = vmatprep.subr.bf16.mxu0 0
        %1389 = vmatpush1.bf16.msra.mxu0 %v1192
        %1390 = vmatprep.subr.bf16.mxu0 0
        %1391 = vmatpush1.bf16.msra.mxu0 %v1189
        %1392 = vmatprep.subr.bf16.mxu0 0
        %1393 = vmatpush1.bf16.msra.mxu0 %v1186
        %1394 = vmatprep.subr.bf16.mxu0 0
        %1395 = vmatpush1.bf16.msra.mxu0 %v1183
        %1396 = vmatprep.subr.bf16.mxu0 0
        %1397 = vmatpush1.bf16.msra.mxu0 %v1180
        %1398 = vmatprep.subr.bf16.mxu0 0
        %1399 = vmatpush1.bf16.msra.mxu0 %v1177
        %1400 = vmatprep.subr.bf16.mxu0 0
        %1401 = vmatpush2.bf16.msra.mxu0 %v1222
        %1402 = vmatprep.subr.bf16.mxu0 0
        %1403 = vmatpush2.bf16.msra.mxu0 %v1219
        %1404 = vmatprep.subr.bf16.mxu0 0
        %1405 = vmatpush2.bf16.msra.mxu0 %v1216
        %1406 = vmatprep.subr.bf16.mxu0 0
        %1407 = vmatpush2.bf16.msra.mxu0 %v1213
        %1408 = vmatprep.subr.bf16.mxu0 0
        %1409 = vmatpush2.bf16.msra.mxu0 %v1210
        %1410 = vmatprep.subr.bf16.mxu0 0
        %1411 = vmatpush2.bf16.msra.mxu0 %v1207
        %1412 = vmatprep.subr.bf16.mxu0 0
        %1413 = vmatpush2.bf16.msra.mxu0 %v1204
        %1414 = vmatprep.subr.bf16.mxu0 0
        %1415 = vmatpush2.bf16.msra.mxu0 %v1201
        %1416 = vmatprep.mubr.bf16.mxu0 %v984
        %1417 = vmatmul.mubr.bf16.gmra.mxu0 %v983
        %v1418 = vpop.f32.mrf.mxu0
        %v1419 = vadd.f32 %v1011, %v1418
        %v1420 = vpop.f32.mrf.mxu0
        %v1421 = vpop.f32.mrf.mxu0
        %v1422 = vadd.f32 %v1011, %v1421
        %v1423 = vpop.f32.mrf.mxu0
        %1424 = vmatprep.mubr.bf16.mxu0 %v986
        %1425 = vmatmul.mubr.bf16.gmra.mxu0 %v985
        %v1426 = vpop.f32.mrf.mxu0
        %v1427 = vadd.f32 %v1011, %v1426
        %v1428 = vpop.f32.mrf.mxu0
        %v1429 = vpop.f32.mrf.mxu0
        %v1430 = vadd.f32 %v1011, %v1429
        %v1431 = vpop.f32.mrf.mxu0
        %1432 = vmatprep.mubr.bf16.mxu0 %v988
        %1433 = vmatmul.mubr.bf16.gmra.mxu0 %v987
        %v1434 = vpop.f32.mrf.mxu0
        %v1435 = vadd.f32 %v1011, %v1434
        %v1436 = vpop.f32.mrf.mxu0
        %v1437 = vpop.f32.mrf.mxu0
        %v1438 = vadd.f32 %v1011, %v1437
        %v1439 = vpop.f32.mrf.mxu0
        %1440 = vmatprep.mubr.bf16.mxu0 %v990
        %1441 = vmatmul.mubr.bf16.gmra.mxu0 %v989
        %v1442 = vpop.f32.mrf.mxu0
        %v1443 = vadd.f32 %v1011, %v1442
        %v1444 = vpop.f32.mrf.mxu0
        %v1445 = vpop.f32.mrf.mxu0
        %v1446 = vadd.f32 %v1011, %v1445
        %v1447 = vpop.f32.mrf.mxu0
        %1448 = vmatprep.mubr.bf16.mxu0 %v992
        %1449 = vmatmul.mubr.bf16.gmra.mxu0 %v991
        %v1450 = vpop.f32.mrf.mxu0
        %v1451 = vadd.f32 %v1011, %v1450
        %v1452 = vpop.f32.mrf.mxu0
        %v1453 = vpop.f32.mrf.mxu0
        %v1454 = vadd.f32 %v1011, %v1453
        %v1455 = vpop.f32.mrf.mxu0
        %1456 = vmatprep.mubr.bf16.mxu0 %v994
        %1457 = vmatmul.mubr.bf16.gmra.mxu0 %v993
        %v1458 = vpop.f32.mrf.mxu0
        %v1459 = vadd.f32 %v1011, %v1458
        %v1460 = vpop.f32.mrf.mxu0
        %v1461 = vpop.f32.mrf.mxu0
        %v1462 = vadd.f32 %v1011, %v1461
        %v1463 = vpop.f32.mrf.mxu0
        %1464 = vmatprep.mubr.bf16.mxu0 %v996
        %1465 = vmatmul.mubr.bf16.gmra.mxu0 %v995
        %v1466 = vpop.f32.mrf.mxu0
        %v1467 = vadd.f32 %v1011, %v1466
        %v1468 = vpop.f32.mrf.mxu0
        %v1469 = vpop.f32.mrf.mxu0
        %v1470 = vadd.f32 %v1011, %v1469
        %v1471 = vpop.f32.mrf.mxu0
        %1472 = vmatprep.mubr.bf16.mxu0 %v998
        %1473 = vmatmul.mubr.bf16.gmra.mxu0 %v997
        %v1474 = vpop.f32.mrf.mxu0
        %v1475 = vadd.f32 %v1011, %v1474
        %v1476 = vpop.f32.mrf.mxu0
        %v1477 = vpop.f32.mrf.mxu0
        %v1478 = vadd.f32 %v1011, %v1477
        %v1479 = vpop.f32.mrf.mxu0
        %1480 = vdwg.mxu0
        %1481 = vst [vmem:[%s166] sm:$0xff] %v1306
        %1482 = vst [vmem:[%s166 + $0x8] sm:$0xff] %v1308
        %1483 = vst [vmem:[%s166 + $0x10] sm:$0xff] %v1419
        %1484 = vst [vmem:[%s166 + $0x18] sm:$0xff] %v1310
        %1485 = vst [vmem:[%s166 + $0x20] sm:$0xff] %v1312
        %1486 = vst [vmem:[%s166 + $0x28] sm:$0xff] %v1422
        %1487 = vst [vmem:[%s166 + $0x30] sm:$0xff] %v1316
        %1488 = vst [vmem:[%s166 + $0x38] sm:$0xff] %v1318
        %1489 = vst [vmem:[%s166 + $0x40] sm:$0xff] %v1427
        %1490 = vst [vmem:[%s166 + $0x48] sm:$0xff] %v1320
        %1491 = vst [vmem:[%s166 + $0x50] sm:$0xff] %v1322
        %1492 = vst [vmem:[%s166 + $0x58] sm:$0xff] %v1430
        %1493 = vst [vmem:[%s166 + $0x60] sm:$0xff] %v1326
        %1494 = vst [vmem:[%s166 + $0x68] sm:$0xff] %v1328
        %1495 = vst [vmem:[%s166 + $0x70] sm:$0xff] %v1435
        %1496 = vst [vmem:[%s166 + $0x78] sm:$0xff] %v1330
        %1497 = vst [vmem:[%s166 + $0x80] sm:$0xff] %v1332
        %1498 = vst [vmem:[%s166 + $0x88] sm:$0xff] %v1438
        %1499 = vst [vmem:[%s166 + $0x90] sm:$0xff] %v1336
        %1500 = vst [vmem:[%s166 + $0x98] sm:$0xff] %v1338
        %1501 = vst [vmem:[%s166 + $0xa0] sm:$0xff] %v1443
        %1502 = vst [vmem:[%s166 + $0xa8] sm:$0xff] %v1340
        %1503 = vst [vmem:[%s166 + $0xb0] sm:$0xff] %v1342
        %1504 = vst [vmem:[%s166 + $0xb8] sm:$0xff] %v1446
        %1505 = vst [vmem:[%s166 + $0xc0] sm:$0xff] %v1346
        %1506 = vst [vmem:[%s166 + $0xc8] sm:$0xff] %v1348
        %1507 = vst [vmem:[%s166 + $0xd0] sm:$0xff] %v1451
        %1508 = vst [vmem:[%s166 + $0xd8] sm:$0xff] %v1350
        %1509 = vst [vmem:[%s166 + $0xe0] sm:$0xff] %v1352
        %1510 = vst [vmem:[%s166 + $0xe8] sm:$0xff] %v1454
        %1511 = vst [vmem:[%s166 + $0xf0] sm:$0xff] %v1356
        %1512 = vst [vmem:[%s166 + $0xf8] sm:$0xff] %v1358
        %1513 = vst [vmem:[%s166 + $0x100] sm:$0xff] %v1459
        %1514 = vst [vmem:[%s166 + $0x108] sm:$0xff] %v1360
        %1515 = vst [vmem:[%s166 + $0x110] sm:$0xff] %v1362
        %1516 = vst [vmem:[%s166 + $0x118] sm:$0xff] %v1462
        %1517 = vst [vmem:[%s166 + $0x120] sm:$0xff] %v1366
        %1518 = vst [vmem:[%s166 + $0x128] sm:$0xff] %v1368
        %1519 = vst [vmem:[%s166 + $0x130] sm:$0xff] %v1467
        %1520 = vst [vmem:[%s166 + $0x138] sm:$0xff] %v1370
        %1521 = vst [vmem:[%s166 + $0x140] sm:$0xff] %v1372
        %1522 = vst [vmem:[%s166 + $0x148] sm:$0xff] %v1470
        %1523 = vst [vmem:[%s166 + $0x150] sm:$0xff] %v1376
        %1524 = vst [vmem:[%s166 + $0x158] sm:$0xff] %v1378
        %1525 = vst [vmem:[%s166 + $0x160] sm:$0xff] %v1475
        %1526 = vst [vmem:[%s166 + $0x168] sm:$0xff] %v1380
        %1527 = vst [vmem:[%s166 + $0x170] sm:$0xff] %v1382
        %1528 = vst [vmem:[%s166 + $0x178] sm:$0xff] %v1478
        %s1529 = sand.u32 %s93, 1
        %s1530 = scalar_lea.sflag [#allocation3], %s1529
        %s1531 = sand.u32 %s93, 1
        %s1532 = smul.addr %s1531, 384
        %s1533 = scalar_lea.vmem [#allocation2], %s1532
        // Predicated region
        $region33: #{mlp_autoencoder_forward.1} parent=31 // pred_check
          %p1534 = pneg %p103
        $region34: #{mlp_autoencoder_forward.1} parent=31 // pred_check_branch
          %1536 = sbr.rel (%p1534) target = $region36
        $region35: #{mlp_autoencoder_forward.1} parent=31 // pred_region
          %s1537 = smul.u32 16, %s17
          %s1539 = ssub.s32 6144, 6144
          %1540 = vsyncadd %s1530, %s1539
          %s1541 = smul.addr %s1537, 3
          %s1542 = smul.addr %s1541, 128
          %s1543 = scalar_lea.hbm %s3, %s1542
          %s1544 = sshll.u32 %s1533, 4
          %s1545 = int_to_ptr.vmem [resolvable:$true] %s1544
          %1550 = dma.vmem_to_hbm [thread:$0]  %s1545, 6144, %s1543, %s1530, 384, 384, 24
        $region36: #{mlp_autoencoder_forward.1} parent=31 // pred_fallthru
          _
      $region32: #{mlp_autoencoder_forward.1} parent=5 // pred_fallthru
        _
      %p1551 = scmp.le.s32.totalorder 2, %s12
      // Predicated region
      $region37: #{mlp_autoencoder_forward.1} parent=5 // pred_check
        %p1552 = pneg %p1551
      $region38: #{mlp_autoencoder_forward.1} parent=5 // pred_check_branch
        %1554 = sbr.rel (%p1552) target = $region40
      $region39: #{mlp_autoencoder_forward.1} parent=5 // pred_region
        %s1555 = ssub.s32 %s12, 2
        // Predicated region
        $region41: #{mlp_autoencoder_forward.1} parent=39 // pred_check
          %p1556 = pneg %p109
        $region42: #{mlp_autoencoder_forward.1} parent=39 // pred_check_branch
          %1558 = sbr.rel (%p1556) target = $region44
        $region43: #{mlp_autoencoder_forward.1} parent=39 // pred_region
          %s1559 = sand.u32 %s94, 1
          %s1560 = scalar_lea.sflag [#allocation3], %s1559
          %s1561 = sand.u32 %s94, 1
          %s1562 = smul.addr %s1561, 384
          %s1563 = scalar_lea.vmem [#allocation2], %s1562
          %1564 = dma.done %s1560, 6144
        $region44: #{mlp_autoencoder_forward.1} parent=39 // pred_fallthru
          _
      $region40: #{mlp_autoencoder_forward.1} parent=5 // pred_fallthru
        _
    $region6: #{mlp_autoencoder_forward.1} parent=1 // loop_footer
      %s16 = sadd.s32 1, %s12
    $region7: #{mlp_autoencoder_forward.1} parent=1 // loop_footer_branch
      %11 = sbr.rel target = $region3
    $region8: #{mlp_autoencoder_forward.1} parent=1 // loop_exit
      _
    %1565 = vsyncpa [#allocation3], 1
    %s1566 = scalar_lea.sflag [#allocation3], 1
    %1567 = vsyncpa %s1566, 1

</llo_original>
